<compile_context>
chip_gen: v5e
topology: v5e:2x2
jax: 0.10.0
libtpu: 0.0.40
codegen_flags: <defaults>
</compile_context>

<pallas_src>
import jax
import jax.numpy as jnp
from jax.experimental import pallas as pl
from jax.experimental.pallas import tpu as pltpu

BN_EPS = 1e-5
NORM_EPS = 1e-12  # F.normalize default eps


def _bnneck_kernel(x_ref, gamma_ref, beta_ref, w_ref, inv_wn_ref,
                   feat_ref, logits_ref):
    """Single invocation over the whole (tiny) problem, in part-major layout.

    x_ref:      [p, n, c]      input, part-major
    gamma_ref:  [p, 1, c]      BN affine scale   (permuted from the flat c*p order)
    beta_ref:   [p, 1, c]      BN affine shift
    w_ref:      [p, c, K_pad]  zero-padded classifier weights (fc_bin)
    inv_wn_ref: [p, 1, K_pad]  reciprocal column L2-norms of fc_bin (0 on pad columns)
    feat_ref:   [p, n, c]      output feature
    logits_ref: [p, n, K_pad]  output logits (lane-dense, K padded to multiple of 128)
    """
    x = x_ref[...]

    # --- BatchNorm1d (training mode: batch mean, biased variance, affine) ---
    # Stats are per (p, c) column over the batch axis, identical to BN over [n, c*p].
    mean = jnp.mean(x, axis=1, keepdims=True)                       # [p, 1, c]
    xc = x - mean
    var = jnp.mean(xc * xc, axis=1, keepdims=True)                  # [p, 1, c]
    y = xc * jax.lax.rsqrt(var + BN_EPS) * gamma_ref[...] + beta_ref[...]

    # --- F.normalize(feature, dim=-1): lane reduction over c per (p, n) row ---
    norm_sq = jnp.sum(y * y, axis=-1, keepdims=True)                # [p, n, 1]
    feat = y * jax.lax.rsqrt(jnp.maximum(norm_sq, NORM_EPS * NORM_EPS))
    feat_ref[...] = feat.astype(feat_ref.dtype)

    # --- per-part classifier: batched MXU matmul, weight L2-norm folded into a scale ---
    logits = jnp.einsum("pnc,pck->pnk", feat, w_ref[...],
                        preferred_element_type=jnp.float32)
    logits_ref[...] = (logits * inv_wn_ref[...]).astype(logits_ref.dtype)


@jax.jit
def separate_bn_necks(x, gamma, beta, fc_bin):
    """x: [n, c, p];  gamma/beta: [c*p];  fc_bin: [p, c, class_num].

    Returns (feature [n, c, p], logits [n, class_num, p]) matching the PyTorch module.
    """
    n, c, p = x.shape
    k = fc_bin.shape[-1]
    k_pad = ((k + 127) // 128) * 128          # lane-dense logits (multiple of 128)

    # Part-major layouts (mirrors the module's feature = x.permute(2, 0, 1)).
    x_pnc = jnp.transpose(x, (2, 0, 1))                               # [p, n, c]  (4 KiB)
    gamma_pc = gamma.reshape(c, p).T.reshape(p, 1, c)                 # flat idx = c_i*p + p_i
    beta_pc = beta.reshape(c, p).T.reshape(p, 1, c)

    # Zero-padded classifier weight and folded-in F.normalize(fc_bin, dim=1) scale.
    w_pad = jnp.pad(fc_bin, ((0, 0), (0, 0), (0, k_pad - k)))         # [p, c, K_pad]
    wn_sq = jnp.sum(fc_bin * fc_bin, axis=1, keepdims=True)           # [p, 1, k]
    inv_wn = jax.lax.rsqrt(jnp.maximum(wn_sq, NORM_EPS * NORM_EPS))
    inv_wn = jnp.pad(inv_wn, ((0, 0), (0, 0), (0, k_pad - k)))        # [p, 1, K_pad]

    flops = 2 * p * n * c * k_pad + 12 * p * n * c
    transcendentals = p * c + p * n
    bytes_accessed = 4 * (2 * p * n * c + 2 * p * c + p * c * k_pad
                          + p * k_pad + p * n * k_pad)

    feat_pnc, logits_pnk = pl.pallas_call(
        _bnneck_kernel,
        out_shape=(
            jax.ShapeDtypeStruct((p, n, c), jnp.float32),
            jax.ShapeDtypeStruct((p, n, k_pad), jnp.float32),
        ),
        in_specs=[pl.BlockSpec(memory_space=pltpu.MemorySpace.VMEM)] * 5,
        out_specs=(
            pl.BlockSpec(memory_space=pltpu.MemorySpace.VMEM),
            pl.BlockSpec(memory_space=pltpu.MemorySpace.VMEM),
        ),
        cost_estimate=pl.CostEstimate(
            flops=flops, transcendentals=transcendentals,
            bytes_accessed=bytes_accessed),
    )(x_pnc, gamma_pc, beta_pc, w_pad, inv_wn)

    # Mirrors the module's feature.permute(1, 2, 0) / logits.permute(1, 2, 0).
    feature = jnp.transpose(feat_pnc, (1, 2, 0))                      # [n, c, p]
    logits = jnp.transpose(logits_pnk[:, :, :k], (1, 2, 0))           # [n, class_num, p]
    return feature, logits


def _reference(x, gamma, beta, fc_bin):
    """Pure-JAX reference mirroring the PyTorch forward (for validation)."""
    n, c, p = x.shape
    xf = x.reshape(n, c * p)
    mean = jnp.mean(xf, axis=0, keepdims=True)
    var = jnp.mean((xf - mean) ** 2, axis=0, keepdims=True)
    xf = (xf - mean) / jnp.sqrt(var + BN_EPS) * gamma[None, :] + beta[None, :]
    xr = xf.reshape(n, c, p)
    feat = jnp.transpose(xr, (2, 0, 1))                               # [p, n, c]
    feat = feat / jnp.maximum(
        jnp.linalg.norm(feat, axis=-1, keepdims=True), NORM_EPS)
    w = fc_bin / jnp.maximum(
        jnp.linalg.norm(fc_bin, axis=1, keepdims=True), NORM_EPS)
    logits = jnp.einsum("pnc,pck->pnk", feat, w)
    return jnp.transpose(feat, (1, 2, 0)), jnp.transpose(logits, (1, 2, 0))


if __name__ == "__main__":
    # Module config (small synthetic shapes matching the module defaults).
    parts_num = 4
    in_channels = 32
    class_num = 155
    batch = 8

    key = jax.random.PRNGKey(0)
    kx, kw = jax.random.split(key)

    # Input x: [n, c, p]
    x = jax.random.normal(kx, (batch, in_channels, parts_num), dtype=jnp.float32)

    # Parameters (deterministic, mirroring __init__):
    #   fc_bin ~ xavier_uniform over [parts_num, in_channels, class_num]
    fan_in = in_channels * class_num
    fan_out = parts_num * class_num
    bound = (6.0 / (fan_in + fan_out)) ** 0.5
    fc_bin = jax.random.uniform(
        kw, (parts_num, in_channels, class_num),
        minval=-bound, maxval=bound, dtype=jnp.float32)
    #   BatchNorm1d(in_channels * parts_num): weight=1, bias=0
    gamma = jnp.ones((in_channels * parts_num,), dtype=jnp.float32)
    beta = jnp.zeros((in_channels * parts_num,), dtype=jnp.float32)

    feature, logits = separate_bn_necks(x, gamma, beta, fc_bin)
    jax.block_until_ready((feature, logits))

    ref_feat, ref_logits = _reference(x, gamma, beta, fc_bin)
    assert feature.shape == (batch, in_channels, parts_num)
    assert logits.shape == (batch, class_num, parts_num)
    assert jnp.allclose(feature, ref_feat, atol=1e-5, rtol=1e-5)
    assert jnp.allclose(logits, ref_logits, atol=1e-5, rtol=1e-5)

    print("KERNEL_OK")
</pallas_src>

<mosaic_0001>
module attributes {stable_mosaic.version = 11 : i64} {
  func.func @_bnneck_kernel(%arg0: memref<4x8x32xf32, #tpu.memory_space<vmem>>, %arg1: memref<4x1x32xf32, #tpu.memory_space<vmem>>, %arg2: memref<4x1x32xf32, #tpu.memory_space<vmem>>, %arg3: memref<4x32x256xf32, #tpu.memory_space<vmem>>, %arg4: memref<4x1x256xf32, #tpu.memory_space<vmem>>, %arg5: memref<4x8x32xf32, #tpu.memory_space<vmem>>, %arg6: memref<4x8x256xf32, #tpu.memory_space<vmem>>) attributes {dimension_semantics = [], scalar_prefetch = 0 : i64, scratch_operands = 0 : i64, tpu.core_type = #tpu.core_type<tc>} {
    %c0 = arith.constant 0 : index
    %c0_0 = arith.constant 0 : index
    %c0_1 = arith.constant 0 : index
    %0 = vector.load %arg0[%c0, %c0_0, %c0_1] : memref<4x8x32xf32, #tpu.memory_space<vmem>>, vector<4x8x32xf32>
    %cst = arith.constant dense<0.000000e+00> : vector<4x32xf32>
    %1 = vector.multi_reduction <add>, %0, %cst [1] : vector<4x8x32xf32> to vector<4x32xf32>
    %2 = vector.shape_cast %1 : vector<4x32xf32> to vector<4x1x32xf32>
    %cst_2 = arith.constant 8.000000e+00 : f32
    %3 = vector.broadcast %cst_2 : f32 to vector<4x1x32xf32>
    %4 = arith.divf %2, %3 : vector<4x1x32xf32>
    %5 = vector.broadcast %4 : vector<4x1x32xf32> to vector<4x8x32xf32>
    %6 = arith.subf %0, %5 : vector<4x8x32xf32>
    %7 = arith.mulf %6, %6 : vector<4x8x32xf32>
    %cst_3 = arith.constant dense<0.000000e+00> : vector<4x32xf32>
    %8 = vector.multi_reduction <add>, %7, %cst_3 [1] : vector<4x8x32xf32> to vector<4x32xf32>
    %9 = vector.shape_cast %8 : vector<4x32xf32> to vector<4x1x32xf32>
    %cst_4 = arith.constant 8.000000e+00 : f32
    %10 = vector.broadcast %cst_4 : f32 to vector<4x1x32xf32>
    %11 = arith.divf %9, %10 : vector<4x1x32xf32>
    %cst_5 = arith.constant 9.99999974E-6 : f32
    %12 = vector.broadcast %cst_5 : f32 to vector<4x1x32xf32>
    %13 = arith.addf %11, %12 : vector<4x1x32xf32>
    %14 = math.rsqrt %13 : vector<4x1x32xf32>
    %15 = vector.broadcast %14 : vector<4x1x32xf32> to vector<4x8x32xf32>
    %16 = arith.mulf %6, %15 : vector<4x8x32xf32>
    %c0_6 = arith.constant 0 : index
    %c0_7 = arith.constant 0 : index
    %c0_8 = arith.constant 0 : index
    %17 = vector.load %arg1[%c0_6, %c0_7, %c0_8] : memref<4x1x32xf32, #tpu.memory_space<vmem>>, vector<4x1x32xf32>
    %18 = vector.broadcast %17 : vector<4x1x32xf32> to vector<4x8x32xf32>
    %19 = arith.mulf %16, %18 : vector<4x8x32xf32>
    %c0_9 = arith.constant 0 : index
    %c0_10 = arith.constant 0 : index
    %c0_11 = arith.constant 0 : index
    %20 = vector.load %arg2[%c0_9, %c0_10, %c0_11] : memref<4x1x32xf32, #tpu.memory_space<vmem>>, vector<4x1x32xf32>
    %21 = vector.broadcast %20 : vector<4x1x32xf32> to vector<4x8x32xf32>
    %22 = arith.addf %19, %21 : vector<4x8x32xf32>
    %23 = arith.mulf %22, %22 : vector<4x8x32xf32>
    %cst_12 = arith.constant dense<0.000000e+00> : vector<4x8xf32>
    %24 = vector.multi_reduction <add>, %23, %cst_12 [2] : vector<4x8x32xf32> to vector<4x8xf32>
    %25 = vector.shape_cast %24 : vector<4x8xf32> to vector<4x8x1xf32>
    %cst_13 = arith.constant 1.000000e-24 : f32
    %26 = vector.broadcast %cst_13 : f32 to vector<4x8x1xf32>
    %27 = arith.maximumf %25, %26 : vector<4x8x1xf32>
    %28 = math.rsqrt %27 : vector<4x8x1xf32>
    %29 = vector.broadcast %28 : vector<4x8x1xf32> to vector<4x8x32xf32>
    %30 = arith.mulf %22, %29 : vector<4x8x32xf32>
    %c0_14 = arith.constant 0 : index
    %c0_15 = arith.constant 0 : index
    %c0_16 = arith.constant 0 : index
    %31 = vector.load %arg5[%c0_14, %c0_15, %c0_16] : memref<4x8x32xf32, #tpu.memory_space<vmem>>, vector<4x8x32xf32>
    tpu.vector_store %arg5[%c0_14, %c0_15, %c0_16], %30 {strides = array<i32>} : memref<4x8x32xf32, #tpu.memory_space<vmem>>, vector<4x8x32xf32>,
    %c0_17 = arith.constant 0 : index
    %c0_18 = arith.constant 0 : index
    %c0_19 = arith.constant 0 : index
    %32 = vector.load %arg3[%c0_17, %c0_18, %c0_19] : memref<4x32x256xf32, #tpu.memory_space<vmem>>, vector<4x32x256xf32>
    "tpu.trace_start"() <{level = 10 : i32, message = "pnc,pck->pnk"}> : () -> ()
    %cst_20 = arith.constant dense<0.000000e+00> : vector<4x8x256xf32>
    %33 = tpu.matmul %30, %32, %cst_20 {dimension_numbers = #tpu.dot_dimension_numbers<[2], [1], [1], [2], [0, 0, 0, 1, 1, 2], [0], [0]>} : vector<4x8x32xf32>, vector<4x32x256xf32>, vector<4x8x256xf32> -> vector<4x8x256xf32>
    "tpu.trace_stop"() : () -> ()
    %c0_21 = arith.constant 0 : index
    %c0_22 = arith.constant 0 : index
    %c0_23 = arith.constant 0 : index
    %34 = vector.load %arg4[%c0_21, %c0_22, %c0_23] : memref<4x1x256xf32, #tpu.memory_space<vmem>>, vector<4x1x256xf32>
    %35 = vector.broadcast %34 : vector<4x1x256xf32> to vector<4x8x256xf32>
    %36 = arith.mulf %33, %35 : vector<4x8x256xf32>
    %c0_24 = arith.constant 0 : index
    %c0_25 = arith.constant 0 : index
    %c0_26 = arith.constant 0 : index
    %37 = vector.load %arg6[%c0_24, %c0_25, %c0_26] : memref<4x8x256xf32, #tpu.memory_space<vmem>>, vector<4x8x256xf32>
    tpu.vector_store %arg6[%c0_24, %c0_25, %c0_26], %36 {strides = array<i32>} : memref<4x8x256xf32, #tpu.memory_space<vmem>>, vector<4x8x256xf32>,
    return
  }
}

</mosaic_0001>

<llo_original>
// kernel: separate_bn_necks.1
$region0: #{separate_bn_necks.1}
  #allocation0 [shape = 'u32[]', space=smem, size = 0x4, offset = 0x4, fixed_abs, tag = 'smem constant byte address 0x4 - core index']
  #allocation1 [shape = 'u32[72,128]{1,0:T(1,128)}', space=vmem, size = 0x9000, scoped, tag = 'internal scratch']
  %s0 = inlined_call_operand.vmem [shape: f32[4,8,32], index: 0, kind: input, shape index: {}]
  %s1 = inlined_call_operand.vmem [shape: f32[4,1,32], index: 1, kind: input, shape index: {}]
  %s2 = inlined_call_operand.vmem [shape: f32[4,1,32], index: 2, kind: input, shape index: {}]
  %s3 = inlined_call_operand.vmem [shape: f32[4,32,256], index: 3, kind: input, shape index: {}]
  %s4 = inlined_call_operand.vmem [shape: f32[4,1,256], index: 4, kind: input, shape index: {}]
  %s5 = inlined_call_operand.vmem [shape: f32[4,8,32], index: 5, kind: output, shape index: {0}]
  %s6 = inlined_call_operand.vmem [shape: f32[4,8,256], index: 6, kind: output, shape index: {1}]
  %7 = xla_tuple %s5, %s6
  %s8 = sld [smem:[#allocation0]]
  $region38: #{separate_bn_necks.1} parent=0
    _
  %s10 = ssub.s32 1, %s8
  %s11 = scalar_select 0, %s10, %s8
  // Predicated region
  $region2: #{separate_bn_necks.1} parent=0 // pred_check
    _
  $region3: #{separate_bn_necks.1} parent=0 // pred_check_branch
    %13 = sbr.rel (0) target = $region5
  $region4: #{separate_bn_necks.1} parent=0 // pred_region
    _
  $region5: #{separate_bn_necks.1} parent=0 // pred_fallthru
    _
  // Predicated region
  $region6: #{separate_bn_necks.1} parent=0 // pred_check
    _
  $region7: #{separate_bn_necks.1} parent=0 // pred_check_branch
    %15 = sbr.rel (0) target = $region9
  $region8: #{separate_bn_necks.1} parent=0 // pred_region
    _
  $region9: #{separate_bn_necks.1} parent=0 // pred_fallthru
    _
  // Predicated region
  $region10: #{separate_bn_necks.1} parent=0 // pred_check
    _
  $region11: #{separate_bn_necks.1} parent=0 // pred_check_branch
    %17 = sbr.rel (0) target = $region13
  $region12: #{separate_bn_necks.1} parent=0 // pred_region
    _
  $region13: #{separate_bn_necks.1} parent=0 // pred_fallthru
    _
  // Predicated region
  $region14: #{separate_bn_necks.1} parent=0 // pred_check
    _
  $region15: #{separate_bn_necks.1} parent=0 // pred_check_branch
    %19 = sbr.rel (0) target = $region17
  $region16: #{separate_bn_necks.1} parent=0 // pred_region
    _
  $region17: #{separate_bn_necks.1} parent=0 // pred_fallthru
    _
  // Predicated region
  $region18: #{separate_bn_necks.1} parent=0 // pred_check
    _
  $region19: #{separate_bn_necks.1} parent=0 // pred_check_branch
    %21 = sbr.rel (0) target = $region21
  $region20: #{separate_bn_necks.1} parent=0 // pred_region
    _
  $region21: #{separate_bn_necks.1} parent=0 // pred_fallthru
    _
  %v22 = vld [vmem:[%s0] sm:$0xff]
  %v23 = vld [vmem:[%s0 + $0x8] sm:$0xff]
  %v24 = vld [vmem:[%s0 + $0x10] sm:$0xff]
  %v25 = vld [vmem:[%s0 + $0x18] sm:$0xff]
  %vm26 = vcmask 261120
  %v27 = vsel %vm26, %v22, 0.0
  %v28 = vrot.slane %v27, 4
  %v29 = vadd.f32 %v27, %v28
  %v30 = vrot.slane %v29, 2
  %v31 = vadd.f32 %v29, %v30
  %v32 = vrot.slane %v31, 1
  %v33 = vadd.f32 %v31, %v32
  %v34 = vsel %vm26, %v23, 0.0
  %v35 = vrot.slane %v34, 4
  %v36 = vadd.f32 %v34, %v35
  %v37 = vrot.slane %v36, 2
  %v38 = vadd.f32 %v36, %v37
  %v39 = vrot.slane %v38, 1
  %v40 = vadd.f32 %v38, %v39
  %v41 = vsel %vm26, %v24, 0.0
  %v42 = vrot.slane %v41, 4
  %v43 = vadd.f32 %v41, %v42
  %v44 = vrot.slane %v43, 2
  %v45 = vadd.f32 %v43, %v44
  %v46 = vrot.slane %v45, 1
  %v47 = vadd.f32 %v45, %v46
  %v48 = vsel %vm26, %v25, 0.0
  %v49 = vrot.slane %v48, 4
  %v50 = vadd.f32 %v48, %v49
  %v51 = vrot.slane %v50, 2
  %v52 = vadd.f32 %v50, %v51
  %v53 = vrot.slane %v52, 1
  %v54 = vadd.f32 %v52, %v53
  %v55 = vrcp.pop 8.0
  %v56 = vmul.f32 8.0, %v55
  %v57 = vsub.f32 1.0, %v56
  %v58 = vmul.f32 %v55, %v57
  %v59 = vadd.f32 %v55, %v58
  %vm60 = vweird.f32 %v55
  %v61 = vsel %vm60, %v55, %v59
  %v62 = vmul.f32 %v33, %v61
  %v63 = vmul.f32 %v40, %v61
  %v64 = vmul.f32 %v47, %v61
  %v65 = vmul.f32 %v54, %v61
  %v66 = vsub.f32 %v22, %v62
  %v67 = vsub.f32 %v23, %v63
  %v68 = vsub.f32 %v24, %v64
  %v69 = vsub.f32 %v25, %v65
  %v70 = vmul.f32 %v66, %v66
  %v71 = vmul.f32 %v67, %v67
  %v72 = vmul.f32 %v68, %v68
  %v73 = vmul.f32 %v69, %v69
  %v74 = vsel %vm26, %v70, 0.0
  %v75 = vrot.slane %v74, 4
  %v76 = vadd.f32 %v74, %v75
  %v77 = vrot.slane %v76, 2
  %v78 = vadd.f32 %v76, %v77
  %v79 = vrot.slane %v78, 1
  %v80 = vadd.f32 %v78, %v79
  %v81 = vsel %vm26, %v71, 0.0
  %v82 = vrot.slane %v81, 4
  %v83 = vadd.f32 %v81, %v82
  %v84 = vrot.slane %v83, 2
  %v85 = vadd.f32 %v83, %v84
  %v86 = vrot.slane %v85, 1
  %v87 = vadd.f32 %v85, %v86
  %v88 = vsel %vm26, %v72, 0.0
  %v89 = vrot.slane %v88, 4
  %v90 = vadd.f32 %v88, %v89
  %v91 = vrot.slane %v90, 2
  %v92 = vadd.f32 %v90, %v91
  %v93 = vrot.slane %v92, 1
  %v94 = vadd.f32 %v92, %v93
  %v95 = vsel %vm26, %v73, 0.0
  %v96 = vrot.slane %v95, 4
  %v97 = vadd.f32 %v95, %v96
  %v98 = vrot.slane %v97, 2
  %v99 = vadd.f32 %v97, %v98
  %v100 = vrot.slane %v99, 1
  %v101 = vadd.f32 %v99, %v100
  %v102 = vmul.f32 %v80, %v61
  %v103 = vmul.f32 %v87, %v61
  %v104 = vmul.f32 %v94, %v61
  %v105 = vmul.f32 %v101, %v61
  %v106 = vadd.f32 %v102, 1e-05
  %v107 = vadd.f32 %v103, 1e-05
  %v108 = vadd.f32 %v104, 1e-05
  %v109 = vadd.f32 %v105, 1e-05
  %v110 = vrsqrt.pop %v106
  %v111 = vmul.f32 %v110, %v106
  %v112 = vmul.f32 %v111, %v110
  %v113 = vmul.f32 0.5, %v112
  %v114 = vsub.f32 1.5, %v113
  %v115 = vmul.f32 %v110, %v114
  %vm116 = vweird.f32 %v106
  %vm117 = vweird.f32 %v110
  %vm118 = vmor %vm116, %vm117
  %v119 = vsel %vm118, %v110, %v115
  %v120 = vrsqrt.pop %v107
  %v121 = vmul.f32 %v120, %v107
  %v122 = vmul.f32 %v121, %v120
  %v123 = vmul.f32 0.5, %v122
  %v124 = vsub.f32 1.5, %v123
  %v125 = vmul.f32 %v120, %v124
  %vm126 = vweird.f32 %v107
  %vm127 = vweird.f32 %v120
  %vm128 = vmor %vm126, %vm127
  %v129 = vsel %vm128, %v120, %v125
  %v130 = vrsqrt.pop %v108
  %v131 = vmul.f32 %v130, %v108
  %v132 = vmul.f32 %v131, %v130
  %v133 = vmul.f32 0.5, %v132
  %v134 = vsub.f32 1.5, %v133
  %v135 = vmul.f32 %v130, %v134
  %vm136 = vweird.f32 %v108
  %vm137 = vweird.f32 %v130
  %vm138 = vmor %vm136, %vm137
  %v139 = vsel %vm138, %v130, %v135
  %v140 = vrsqrt.pop %v109
  %v141 = vmul.f32 %v140, %v109
  %v142 = vmul.f32 %v141, %v140
  %v143 = vmul.f32 0.5, %v142
  %v144 = vsub.f32 1.5, %v143
  %v145 = vmul.f32 %v140, %v144
  %vm146 = vweird.f32 %v109
  %vm147 = vweird.f32 %v140
  %vm148 = vmor %vm146, %vm147
  %v149 = vsel %vm148, %v140, %v145
  %v150 = vmul.f32 %v66, %v119
  %v151 = vmul.f32 %v67, %v129
  %v152 = vmul.f32 %v68, %v139
  %v153 = vmul.f32 %v69, %v149
  %v154 = vld [vmem:[%s1] sm:$0x1]
  %v155 = vld [vmem:[%s1 + $0x1] sm:$0x1]
  %v156 = vld [vmem:[%s1 + $0x2] sm:$0x1]
  %v157 = vld [vmem:[%s1 + $0x3] sm:$0x1]
  %v162 = vperm.slane %v154, 0
  %v163 = vperm.slane %v155, 0
  %v164 = vperm.slane %v156, 0
  %v165 = vperm.slane %v157, 0
  %v170 = vmul.f32 %v150, %v162
  %v171 = vmul.f32 %v151, %v163
  %v172 = vmul.f32 %v152, %v164
  %v173 = vmul.f32 %v153, %v165
  %v174 = vld [vmem:[%s2] sm:$0x1]
  %v175 = vld [vmem:[%s2 + $0x1] sm:$0x1]
  %v176 = vld [vmem:[%s2 + $0x2] sm:$0x1]
  %v177 = vld [vmem:[%s2 + $0x3] sm:$0x1]
  %v182 = vperm.slane %v174, 0
  %v183 = vperm.slane %v175, 0
  %v184 = vperm.slane %v176, 0
  %v185 = vperm.slane %v177, 0
  %v190 = vadd.f32 %v170, %v182
  %v191 = vadd.f32 %v171, %v183
  %v192 = vadd.f32 %v172, %v184
  %v193 = vadd.f32 %v173, %v185
  %v194 = vmul.f32 %v190, %v190
  %v195 = vmul.f32 %v191, %v191
  %v196 = vmul.f32 %v192, %v192
  %v197 = vmul.f32 %v193, %v193
  %v198 = vsel %vm26, %v194, 0.0
  %199 = vadd.xlane.f32.xlu0 %v198
  %v200 = vpop.xlane.xlu0 %199
  %v201 = vsel %vm26, %v195, 0.0
  %202 = vadd.xlane.f32.xlu0 %v201
  %v203 = vpop.xlane.xlu0 %202
  %v204 = vsel %vm26, %v196, 0.0
  %205 = vadd.xlane.f32.xlu0 %v204
  %v206 = vpop.xlane.xlu0 %205
  %v207 = vsel %vm26, %v197, 0.0
  %208 = vadd.xlane.f32.xlu0 %v207
  %v209 = vpop.xlane.xlu0 %208
  %v210 = vmax.f32 %v200, 1e-24
  %v211 = vmax.f32 %v203, 1e-24
  %v212 = vmax.f32 %v206, 1e-24
  %v213 = vmax.f32 %v209, 1e-24
  %v214 = vrsqrt.pop %v210
  %v215 = vmul.f32 %v214, %v210
  %v216 = vmul.f32 %v215, %v214
  %v217 = vmul.f32 0.5, %v216
  %v218 = vsub.f32 1.5, %v217
  %v219 = vmul.f32 %v214, %v218
  %vm220 = vweird.f32 %v210
  %vm221 = vweird.f32 %v214
  %vm222 = vmor %vm220, %vm221
  %v223 = vsel %vm222, %v214, %v219
  %v224 = vrsqrt.pop %v211
  %v225 = vmul.f32 %v224, %v211
  %v226 = vmul.f32 %v225, %v224
  %v227 = vmul.f32 0.5, %v226
  %v228 = vsub.f32 1.5, %v227
  %v229 = vmul.f32 %v224, %v228
  %vm230 = vweird.f32 %v211
  %vm231 = vweird.f32 %v224
  %vm232 = vmor %vm230, %vm231
  %v233 = vsel %vm232, %v224, %v229
  %v234 = vrsqrt.pop %v212
  %v235 = vmul.f32 %v234, %v212
  %v236 = vmul.f32 %v235, %v234
  %v237 = vmul.f32 0.5, %v236
  %v238 = vsub.f32 1.5, %v237
  %v239 = vmul.f32 %v234, %v238
  %vm240 = vweird.f32 %v212
  %vm241 = vweird.f32 %v234
  %vm242 = vmor %vm240, %vm241
  %v243 = vsel %vm242, %v234, %v239
  %v244 = vrsqrt.pop %v213
  %v245 = vmul.f32 %v244, %v213
  %v246 = vmul.f32 %v245, %v244
  %v247 = vmul.f32 0.5, %v246
  %v248 = vsub.f32 1.5, %v247
  %v249 = vmul.f32 %v244, %v248
  %vm250 = vweird.f32 %v213
  %vm251 = vweird.f32 %v244
  %vm252 = vmor %vm250, %vm251
  %v253 = vsel %vm252, %v244, %v249
  %v254 = vmul.f32 %v190, %v223
  %v255 = vmul.f32 %v191, %v233
  %v256 = vmul.f32 %v192, %v243
  %v257 = vmul.f32 %v193, %v253
  %258 = vst.msk [vmem:[%s5] sm:$0xff] %vm26, %v254
  %259 = vst.msk [vmem:[%s5 + $0x8] sm:$0xff] %vm26, %v255
  %260 = vst.msk [vmem:[%s5 + $0x10] sm:$0xff] %vm26, %v256
  %261 = vst.msk [vmem:[%s5 + $0x18] sm:$0xff] %vm26, %v257
  %v262 = vld [vmem:[%s3] sm:$0xff]
  %v263 = vld [vmem:[%s3 + $0x8] sm:$0xff]
  %v264 = vld [vmem:[%s3 + $0x10] sm:$0xff]
  %v265 = vld [vmem:[%s3 + $0x18] sm:$0xff]
  %v266 = vld [vmem:[%s3 + $0x20] sm:$0xff]
  %v267 = vld [vmem:[%s3 + $0x28] sm:$0xff]
  %v268 = vld [vmem:[%s3 + $0x30] sm:$0xff]
  %v269 = vld [vmem:[%s3 + $0x38] sm:$0xff]
  %v270 = vld [vmem:[%s3 + $0x40] sm:$0xff]
  %v271 = vld [vmem:[%s3 + $0x48] sm:$0xff]
  %v272 = vld [vmem:[%s3 + $0x50] sm:$0xff]
  %v273 = vld [vmem:[%s3 + $0x58] sm:$0xff]
  %v274 = vld [vmem:[%s3 + $0x60] sm:$0xff]
  %v275 = vld [vmem:[%s3 + $0x68] sm:$0xff]
  %v276 = vld [vmem:[%s3 + $0x70] sm:$0xff]
  %v277 = vld [vmem:[%s3 + $0x78] sm:$0xff]
  %v278 = vld [vmem:[%s3 + $0x80] sm:$0xff]
  %v279 = vld [vmem:[%s3 + $0x88] sm:$0xff]
  %v280 = vld [vmem:[%s3 + $0x90] sm:$0xff]
  %v281 = vld [vmem:[%s3 + $0x98] sm:$0xff]
  %v282 = vld [vmem:[%s3 + $0xa0] sm:$0xff]
  %v283 = vld [vmem:[%s3 + $0xa8] sm:$0xff]
  %v284 = vld [vmem:[%s3 + $0xb0] sm:$0xff]
  %v285 = vld [vmem:[%s3 + $0xb8] sm:$0xff]
  %v286 = vld [vmem:[%s3 + $0xc0] sm:$0xff]
  %v287 = vld [vmem:[%s3 + $0xc8] sm:$0xff]
  %v288 = vld [vmem:[%s3 + $0xd0] sm:$0xff]
  %v289 = vld [vmem:[%s3 + $0xd8] sm:$0xff]
  %v290 = vld [vmem:[%s3 + $0xe0] sm:$0xff]
  %v291 = vld [vmem:[%s3 + $0xe8] sm:$0xff]
  %v292 = vld [vmem:[%s3 + $0xf0] sm:$0xff]
  %v293 = vld [vmem:[%s3 + $0xf8] sm:$0xff]
  %v295 = vsel %vm26, %v254, 0
  %297 = vmatpush.msra.mxu0 0.0
  %298 = vmatpush.msra.mxu0 0.0
  %299 = vmatpush.msra.mxu0 0.0
  %300 = vmatpush.msra.mxu0 0.0
  %301 = vmatpush.msra.mxu0 0.0
  %302 = vmatpush.msra.mxu0 0.0
  %303 = vmatpush.msra.mxu0 0.0
  %304 = vmatpush.msra.mxu0 0.0
  %305 = vmatpush.msra.mxu0 0.0
  %306 = vmatpush.msra.mxu0 0.0
  %307 = vmatpush.msra.mxu0 0.0
  %308 = vmatpush.msra.mxu0 0.0
  %309 = vmatpush.msra.mxu0 %v268
  %310 = vmatpush.msra.mxu0 %v266
  %311 = vmatpush.msra.mxu0 %v264
  %312 = vmatpush.msra.mxu0 %v262
  %313 = vmatmul.f32.gmra.mxu0 %v295
  %v314 = vpop.f32.mrf.mxu0
  %v315 = vadd.f32 0.0, %v314
  %316 = vdwg.mxu0
  %317 = vmatpush.msra.mxu0 0.0
  %318 = vmatpush.msra.mxu0 0.0
  %319 = vmatpush.msra.mxu0 0.0
  %320 = vmatpush.msra.mxu0 0.0
  %321 = vmatpush.msra.mxu0 0.0
  %322 = vmatpush.msra.mxu0 0.0
  %323 = vmatpush.msra.mxu0 0.0
  %324 = vmatpush.msra.mxu0 0.0
  %325 = vmatpush.msra.mxu0 0.0
  %326 = vmatpush.msra.mxu0 0.0
  %327 = vmatpush.msra.mxu0 0.0
  %328 = vmatpush.msra.mxu0 0.0
  %329 = vmatpush.msra.mxu0 %v269
  %330 = vmatpush.msra.mxu0 %v267
  %331 = vmatpush.msra.mxu0 %v265
  %332 = vmatpush.msra.mxu0 %v263
  %333 = vmatmul.f32.gmra.mxu0 %v295
  %v334 = vpop.f32.mrf.mxu0
  %v335 = vadd.f32 0.0, %v334
  %336 = vdwg.mxu0
  %v338 = vsel %vm26, %v255, 0
  %340 = vmatpush.msra.mxu0 0.0
  %341 = vmatpush.msra.mxu0 0.0
  %342 = vmatpush.msra.mxu0 0.0
  %343 = vmatpush.msra.mxu0 0.0
  %344 = vmatpush.msra.mxu0 0.0
  %345 = vmatpush.msra.mxu0 0.0
  %346 = vmatpush.msra.mxu0 0.0
  %347 = vmatpush.msra.mxu0 0.0
  %348 = vmatpush.msra.mxu0 0.0
  %349 = vmatpush.msra.mxu0 0.0
  %350 = vmatpush.msra.mxu0 0.0
  %351 = vmatpush.msra.mxu0 0.0
  %352 = vmatpush.msra.mxu0 %v276
  %353 = vmatpush.msra.mxu0 %v274
  %354 = vmatpush.msra.mxu0 %v272
  %355 = vmatpush.msra.mxu0 %v270
  %356 = vmatmul.f32.gmra.mxu0 %v338
  %v357 = vpop.f32.mrf.mxu0
  %v358 = vadd.f32 0.0, %v357
  %359 = vdwg.mxu0
  %360 = vmatpush.msra.mxu0 0.0
  %361 = vmatpush.msra.mxu0 0.0
  %362 = vmatpush.msra.mxu0 0.0
  %363 = vmatpush.msra.mxu0 0.0
  %364 = vmatpush.msra.mxu0 0.0
  %365 = vmatpush.msra.mxu0 0.0
  %366 = vmatpush.msra.mxu0 0.0
  %367 = vmatpush.msra.mxu0 0.0
  %368 = vmatpush.msra.mxu0 0.0
  %369 = vmatpush.msra.mxu0 0.0
  %370 = vmatpush.msra.mxu0 0.0
  %371 = vmatpush.msra.mxu0 0.0
  %372 = vmatpush.msra.mxu0 %v277
  %373 = vmatpush.msra.mxu0 %v275
  %374 = vmatpush.msra.mxu0 %v273
  %375 = vmatpush.msra.mxu0 %v271
  %376 = vmatmul.f32.gmra.mxu0 %v338
  %v377 = vpop.f32.mrf.mxu0
  %v378 = vadd.f32 0.0, %v377
  %379 = vdwg.mxu0
  %v381 = vsel %vm26, %v256, 0
  %383 = vmatpush.msra.mxu0 0.0
  %384 = vmatpush.msra.mxu0 0.0
  %385 = vmatpush.msra.mxu0 0.0
  %386 = vmatpush.msra.mxu0 0.0
  %387 = vmatpush.msra.mxu0 0.0
  %388 = vmatpush.msra.mxu0 0.0
  %389 = vmatpush.msra.mxu0 0.0
  %390 = vmatpush.msra.mxu0 0.0
  %391 = vmatpush.msra.mxu0 0.0
  %392 = vmatpush.msra.mxu0 0.0
  %393 = vmatpush.msra.mxu0 0.0
  %394 = vmatpush.msra.mxu0 0.0
  %395 = vmatpush.msra.mxu0 %v284
  %396 = vmatpush.msra.mxu0 %v282
  %397 = vmatpush.msra.mxu0 %v280
  %398 = vmatpush.msra.mxu0 %v278
  %399 = vmatmul.f32.gmra.mxu0 %v381
  %v400 = vpop.f32.mrf.mxu0
  %v401 = vadd.f32 0.0, %v400
  %402 = vdwg.mxu0
  %403 = vmatpush.msra.mxu0 0.0
  %404 = vmatpush.msra.mxu0 0.0
  %405 = vmatpush.msra.mxu0 0.0
  %406 = vmatpush.msra.mxu0 0.0
  %407 = vmatpush.msra.mxu0 0.0
  %408 = vmatpush.msra.mxu0 0.0
  %409 = vmatpush.msra.mxu0 0.0
  %410 = vmatpush.msra.mxu0 0.0
  %411 = vmatpush.msra.mxu0 0.0
  %412 = vmatpush.msra.mxu0 0.0
  %413 = vmatpush.msra.mxu0 0.0
  %414 = vmatpush.msra.mxu0 0.0
  %415 = vmatpush.msra.mxu0 %v285
  %416 = vmatpush.msra.mxu0 %v283
  %417 = vmatpush.msra.mxu0 %v281
  %418 = vmatpush.msra.mxu0 %v279
  %419 = vmatmul.f32.gmra.mxu0 %v381
  %v420 = vpop.f32.mrf.mxu0
  %v421 = vadd.f32 0.0, %v420
  %422 = vdwg.mxu0
  %v424 = vsel %vm26, %v257, 0
  %426 = vmatpush.msra.mxu0 0.0
  %427 = vmatpush.msra.mxu0 0.0
  %428 = vmatpush.msra.mxu0 0.0
  %429 = vmatpush.msra.mxu0 0.0
  %430 = vmatpush.msra.mxu0 0.0
  %431 = vmatpush.msra.mxu0 0.0
  %432 = vmatpush.msra.mxu0 0.0
  %433 = vmatpush.msra.mxu0 0.0
  %434 = vmatpush.msra.mxu0 0.0
  %435 = vmatpush.msra.mxu0 0.0
  %436 = vmatpush.msra.mxu0 0.0
  %437 = vmatpush.msra.mxu0 0.0
  %438 = vmatpush.msra.mxu0 %v292
  %439 = vmatpush.msra.mxu0 %v290
  %440 = vmatpush.msra.mxu0 %v288
  %441 = vmatpush.msra.mxu0 %v286
  %442 = vmatmul.f32.gmra.mxu0 %v424
  %v443 = vpop.f32.mrf.mxu0
  %v444 = vadd.f32 0.0, %v443
  %445 = vdwg.mxu0
  %446 = vmatpush.msra.mxu0 0.0
  %447 = vmatpush.msra.mxu0 0.0
  %448 = vmatpush.msra.mxu0 0.0
  %449 = vmatpush.msra.mxu0 0.0
  %450 = vmatpush.msra.mxu0 0.0
  %451 = vmatpush.msra.mxu0 0.0
  %452 = vmatpush.msra.mxu0 0.0
  %453 = vmatpush.msra.mxu0 0.0
  %454 = vmatpush.msra.mxu0 0.0
  %455 = vmatpush.msra.mxu0 0.0
  %456 = vmatpush.msra.mxu0 0.0
  %457 = vmatpush.msra.mxu0 0.0
  %458 = vmatpush.msra.mxu0 %v293
  %459 = vmatpush.msra.mxu0 %v291
  %460 = vmatpush.msra.mxu0 %v289
  %461 = vmatpush.msra.mxu0 %v287
  %462 = vmatmul.f32.gmra.mxu0 %v424
  %v463 = vpop.f32.mrf.mxu0
  %v464 = vadd.f32 0.0, %v463
  %465 = vdwg.mxu0
  %v466 = vld [vmem:[%s4] sm:$0x3]
  %v467 = vld [vmem:[%s4 + $0x2] sm:$0x3]
  %v468 = vld [vmem:[%s4 + $0x4] sm:$0x3]
  %v469 = vld [vmem:[%s4 + $0x6] sm:$0x3]
  %v474 = vperm.slane %v466, 0
  %v475 = vperm.slane %v466, 1
  %v476 = vperm.slane %v467, 0
  %v477 = vperm.slane %v467, 1
  %v478 = vperm.slane %v468, 0
  %v479 = vperm.slane %v468, 1
  %v480 = vperm.slane %v469, 0
  %v481 = vperm.slane %v469, 1
  %v490 = vmul.f32 %v315, %v474
  %v491 = vmul.f32 %v335, %v475
  %v492 = vmul.f32 %v358, %v476
  %v493 = vmul.f32 %v378, %v477
  %v494 = vmul.f32 %v401, %v478
  %v495 = vmul.f32 %v421, %v479
  %v496 = vmul.f32 %v444, %v480
  %v497 = vmul.f32 %v464, %v481
  %498 = vst [vmem:[%s6] sm:$0xff] %v490
  %499 = vst [vmem:[%s6 + $0x8] sm:$0xff] %v491
  %500 = vst [vmem:[%s6 + $0x10] sm:$0xff] %v492
  %501 = vst [vmem:[%s6 + $0x18] sm:$0xff] %v493
  %502 = vst [vmem:[%s6 + $0x20] sm:$0xff] %v494
  %503 = vst [vmem:[%s6 + $0x28] sm:$0xff] %v495
  %504 = vst [vmem:[%s6 + $0x30] sm:$0xff] %v496
  %505 = vst [vmem:[%s6 + $0x38] sm:$0xff] %v497
  // Predicated region
  $region22: #{separate_bn_necks.1} parent=0 // pred_check
    _
  $region23: #{separate_bn_necks.1} parent=0 // pred_check_branch
    %507 = sbr.rel (0) target = $region25
  $region24: #{separate_bn_necks.1} parent=0 // pred_region
    _
  $region25: #{separate_bn_necks.1} parent=0 // pred_fallthru
    _
  // Predicated region
  $region26: #{separate_bn_necks.1} parent=0 // pred_check
    _
  $region27: #{separate_bn_necks.1} parent=0 // pred_check_branch
    %509 = sbr.rel (0) target = $region29
  $region28: #{separate_bn_necks.1} parent=0 // pred_region
    _
  $region29: #{separate_bn_necks.1} parent=0 // pred_fallthru
    _
  // Predicated region
  $region30: #{separate_bn_necks.1} parent=0 // pred_check
    _
  $region31: #{separate_bn_necks.1} parent=0 // pred_check_branch
    %511 = sbr.rel (0) target = $region33
  $region32: #{separate_bn_necks.1} parent=0 // pred_region
    _
  $region33: #{separate_bn_necks.1} parent=0 // pred_fallthru
    _
  // Predicated region
  $region34: #{separate_bn_necks.1} parent=0 // pred_check
    _
  $region35: #{separate_bn_necks.1} parent=0 // pred_check_branch
    %513 = sbr.rel (0) target = $region37
  $region36: #{separate_bn_necks.1} parent=0 // pred_region
    _
  $region37: #{separate_bn_necks.1} parent=0 // pred_fallthru
    _

</llo_original>
